<compile_context>
chip_gen: v7x
topology: tpu7x:2x2x1
jax: 0.10.0
libtpu: 0.0.40
codegen_flags: <defaults>
</compile_context>

<pallas_src>
import math

import jax
import jax.numpy as jnp
from jax.experimental import pallas as pl
from jax.experimental.pallas import tpu as pltpu

_MIB = 1024 * 1024


# ---------------------------------------------------------------------------
# Kernels
# ---------------------------------------------------------------------------
def _mxu_block_kernel(x_ref, w_ref, y_ref):
    """MXU path. x:(B,TF,K)  w:(TF,K,N)  y:(B,TF,N). Bias is a row of w (ones col in x)."""
    y_ref[...] = jnp.einsum(
        'bfk,fkn->bfn', x_ref[...], w_ref[...],
        preferred_element_type=jnp.float32).astype(y_ref.dtype)


def _make_vpu_block_kernel(k_dim):
    """VPU fallback for tiny M/K (B < 8 or 2*Cin < 32): unrolled broadcast-FMAs over k."""
    def _vpu_block_kernel(x_ref, w_ref, y_ref):
        x = x_ref[...].astype(jnp.float32)     # (B, TF, K)
        w = w_ref[...].astype(jnp.float32)     # (TF, K, N)
        acc = jnp.zeros(y_ref.shape, jnp.float32)
        for k in range(k_dim):                 # static unroll; K is small on this path
            acc = acc + x[:, :, k:k + 1] * w[jnp.newaxis, :, k, :]
        y_ref[...] = acc.astype(y_ref.dtype)
    return _vpu_block_kernel


# ---------------------------------------------------------------------------
# Generation-aware sizing
# ---------------------------------------------------------------------------
def _vmem_params():
    """Return (tile_budget_bytes, vmem_limit_bytes, prefer_freq_split)."""
    cap = 64 * _MIB
    try:
        info = pltpu.get_tpu_info()
        cap = int(getattr(info, "vmem_capacity_bytes", cap))
    except Exception:
        pass
    if cap >= 96 * _MIB:
        # v5e / v6e class: 128 MiB physical VMEM, single TensorCore.
        return cap // 4, min((cap * 3) // 4, 96 * _MIB), False
    # v7x class: 64 MiB per TC, 2 TCs -> conservative budget, allow F split across TCs.
    return max(cap // 8, 8 * _MIB), min((cap * 3) // 4, 48 * _MIB), True


def _choose_freq_tile(num_freqs, batch, k_dim, n_out, param_itemsize,
                      budget_bytes, prefer_split):
    """Pick TF (frequencies per grid step) against the VMEM budget (double-buffered)."""
    per_freq = (batch * k_dim * param_itemsize      # x block
                + k_dim * n_out * param_itemsize    # weight block (dominant stream)
                + batch * n_out * 4)                # f32 output block
    tf = max(1, budget_bytes // (2 * per_freq))
    if prefer_split and num_freqs >= 16:
        tf = min(tf, -(-num_freqs // 2))            # >=2 grid steps only on 2-TC parts
    if tf >= num_freqs:
        return num_freqs                            # whole band in one block
    return min(num_freqs, max(8, (tf // 8) * 8))    # 2nd-minor block dim: multiple of 8


# ---------------------------------------------------------------------------
# Pallas call wrapper
# ---------------------------------------------------------------------------
def banded_complex_matmul(x_packed, w_packed, *, tf, use_vpu, vmem_limit_bytes):
    """F-tiled fused complex matmul (+bias via folded row).

    x_packed: (B, F, K=2*Cin+1)   packed [Re | Im | 1]
    w_packed: (F, K, N)           packed [[wr,wi],[-wi,wr],[br,bi]] (lane padded)
    returns   (B, F, N) float32 = [yr | yi | 0-pad]
    """
    batch, f, kp = x_packed.shape
    n_out = w_packed.shape[-1]
    grid = (pl.cdiv(f, tf),)
    kernel = _make_vpu_block_kernel(kp) if use_vpu else _mxu_block_kernel

    return pl.pallas_call(
        kernel,
        out_shape=jax.ShapeDtypeStruct((batch, f, n_out), jnp.float32),
        grid_spec=pltpu.PrefetchScalarGridSpec(
            num_scalar_prefetch=0,
            grid=grid,
            in_specs=[
                pl.BlockSpec((batch, tf, kp), lambda i: (0, i, 0)),
                pl.BlockSpec((tf, kp, n_out), lambda i: (i, 0, 0)),
            ],
            out_specs=pl.BlockSpec((batch, tf, n_out), lambda i: (0, i, 0)),
        ),
        compiler_params=pltpu.CompilerParams(
            dimension_semantics=("parallel",),
            vmem_limit_bytes=vmem_limit_bytes,
        ),
    )(x_packed, w_packed)


# ---------------------------------------------------------------------------
# Layer
# ---------------------------------------------------------------------------
class BandedFourierLayer:
    """JAX/Pallas re-implementation of the PyTorch BandedFourierLayer forward."""

    def __init__(self, in_channels, out_channels, band, num_bands, length=201,
                 compute_dtype=jnp.bfloat16, key=jax.random.PRNGKey(0)):
        self.length = length
        self.total_freqs = self.length // 2 + 1
        self.in_channels = in_channels
        self.out_channels = out_channels
        self.band = band
        self.num_bands = num_bands
        self.num_freqs = self.total_freqs // self.num_bands + (
            self.total_freqs % self.num_bands
            if self.band == self.num_bands - 1 else 0)
        self.start = self.band * (self.total_freqs // self.num_bands)
        self.end = self.start + self.num_freqs
        self.compute_dtype = compute_dtype

        # TODO(synk): synthetic kaiming-style init for complex params (PyTorch's exact
        # complex kaiming_uniform_ is not reproduced bit-for-bit; only matters for parity
        # with torch-initialized weights).
        fan_in = in_channels * out_channels
        gain = math.sqrt(2.0 / (1.0 + 5.0))              # a = sqrt(5)
        w_bound = gain * math.sqrt(3.0 / fan_in)
        b_bound = 1.0 / math.sqrt(fan_in)
        k_wr, k_wi, k_br, k_bi = jax.random.split(key, 4)
        wshape = (self.num_freqs, in_channels, out_channels)
        bshape = (self.num_freqs, 1, out_channels)
        self.w_re = jax.random.uniform(k_wr, wshape, jnp.float32, -w_bound, w_bound)
        self.w_im = jax.random.uniform(k_wi, wshape, jnp.float32, -w_bound, w_bound)
        self.b_re = jax.random.uniform(k_br, bshape, jnp.float32, -b_bound, b_bound)
        self.b_im = jax.random.uniform(k_bi, bshape, jnp.float32, -b_bound, b_bound)

        # Packed complex weight, built ONCE (no per-call re-pad):
        #   [xr | xi | 1] @ [[wr, wi], [-wi, wr], [br, bi]] = [yr | yi]
        two_cout = 2 * out_channels
        # Lane padding only when the output width is already substantial; tiny widths
        # keep the exact extent (legal full-dim block) to avoid 8x zero write traffic.
        self.n_out = ((two_cout + 127) // 128) * 128 if two_cout >= 64 else two_cout
        w_top = jnp.concatenate([self.w_re, self.w_im], axis=-1)    # (F, Cin, 2Cout)
        w_bot = jnp.concatenate([-self.w_im, self.w_re], axis=-1)   # (F, Cin, 2Cout)
        b_row = jnp.concatenate([self.b_re, self.b_im], axis=-1)    # (F, 1,   2Cout)
        w_packed = jnp.concatenate([w_top, w_bot, b_row], axis=1)   # (F, 2Cin+1, 2Cout)
        w_packed = jnp.pad(w_packed, ((0, 0), (0, 0), (0, self.n_out - two_cout)))
        self.w_packed = w_packed.astype(compute_dtype)
        self.k_dim = 2 * in_channels + 1

    def __call__(self, x):
        # x: (B, T, Cin) float32
        b, t, _ = x.shape
        cout = self.out_channels
        f = self.num_freqs

        # TODO(synk): rfft/irfft have no Pallas TPU primitive; kept as XLA ops.
        x_fft = jnp.fft.rfft(x, axis=1)                       # (B, T//2+1, Cin) c64
        band = x_fft[:, self.start:self.end]                  # (B, F, Cin)

        # Pack [Re | Im | 1] along channels (the '1' column folds the bias into the matmul).
        ones = jnp.ones((b, f, 1), jnp.float32)
        x_packed = jnp.concatenate(
            [jnp.real(band), jnp.imag(band), ones], axis=-1
        ).astype(self.compute_dtype)                          # (B, F, 2Cin+1)

        budget, vmem_limit, prefer_split = _vmem_params()
        tf = _choose_freq_tile(f, b, self.k_dim, self.n_out,
                               self.w_packed.dtype.itemsize, budget, prefer_split)
        # MXU M dim is B, K dim is 2*Cin+1: fall back to VPU FMAs when both are tiny.
        use_vpu = (b < 8 or 2 * self.in_channels < 32) and self.k_dim <= 128

        y = banded_complex_matmul(x_packed, self.w_packed, tf=tf, use_vpu=use_vpu,
                                  vmem_limit_bytes=vmem_limit)  # (B, F, n_out) f32

        y_c = jax.lax.complex(y[:, :, :cout], y[:, :, cout:2 * cout])  # (B, F, Cout) c64
        out_fft = jnp.zeros((b, t // 2 + 1, cout), dtype=jnp.complex64)
        out_fft = out_fft.at[:, self.start:self.end].set(y_c)
        return jnp.fft.irfft(out_fft, n=t, axis=1)            # (B, T, Cout) f32


# ---------------------------------------------------------------------------
# Pure-JAX reference (mirrors the PyTorch forward)
# ---------------------------------------------------------------------------
def _reference_forward(layer, x):
    b, t, _ = x.shape
    x_fft = jnp.fft.rfft(x, axis=1)
    band = x_fft[:, layer.start:layer.end]
    w = (layer.w_re + 1j * layer.w_im).astype(jnp.complex64)
    bias = (layer.b_re[:, 0, :] + 1j * layer.b_im[:, 0, :]).astype(jnp.complex64)
    y = jnp.einsum('bti,tio->bto', band, w) + bias
    out_fft = jnp.zeros((b, t // 2 + 1, layer.out_channels), dtype=jnp.complex64)
    out_fft = out_fft.at[:, layer.start:layer.end].set(y)
    return jnp.fft.irfft(out_fft, n=t, axis=1)


if __name__ == "__main__":
    key = jax.random.PRNGKey(0)
    k_param, k_x = jax.random.split(key)

    B, T, CIN, COUT = 2, 16, 4, 8
    NUM_BANDS, BAND = 2, 1          # band 1 of 2 -> freqs [4, 9) of 9 total

    x = jax.random.normal(k_x, (B, T, CIN), dtype=jnp.float32)

    # Strict-precision path (f32 params/activations): 1e-4 check vs the reference.
    layer_f32 = BandedFourierLayer(CIN, COUT, BAND, NUM_BANDS, length=T,
                                   compute_dtype=jnp.float32, key=k_param)
    out_f32 = jax.block_until_ready(layer_f32(x))
    ref = jax.block_until_ready(_reference_forward(layer_f32, x))
    assert out_f32.shape == (B, T, COUT)
    assert jnp.allclose(out_f32, ref, rtol=1e-4, atol=1e-4), "f32 path mismatch"

    # Default bf16 weight/activation path (halved weight DMA bytes, f32 accumulation).
    layer_bf16 = BandedFourierLayer(CIN, COUT, BAND, NUM_BANDS, length=T,
                                    compute_dtype=jnp.bfloat16, key=k_param)
    out_bf16 = jax.block_until_ready(layer_bf16(x))
    assert out_bf16.shape == (B, T, COUT)
    assert jnp.allclose(out_bf16, ref, rtol=1e-1, atol=1e-1), "bf16 path mismatch"

    print("KERNEL_OK")
</pallas_src>

<mosaic_0001>
module attributes {stable_mosaic.version = 11 : i64} {
  func.func @_vpu_block_kernel(%arg0: i32, %arg1: memref<2x5x9xf32, #tpu.memory_space<vmem>>, %arg2: memref<5x9x16xf32, #tpu.memory_space<vmem>>, %arg3: memref<2x5x16xf32, #tpu.memory_space<vmem>>) attributes {dimension_semantics = [#tpu.dimension_semantics<parallel>], iteration_bounds = array<i64: 1>, scalar_prefetch = 0 : i64, scratch_operands = 0 : i64, tpu.core_type = #tpu.core_type<tc>, window_params = [{transform_indices = @transform_0, window_bounds = array<i64: 2, 5, 9>}, {transform_indices = @transform_1, window_bounds = array<i64: 5, 9, 16>}, {transform_indices = @transform_2, window_bounds = array<i64: 2, 5, 16>}]} {
    %c0 = arith.constant 0 : index
    %c0_0 = arith.constant 0 : index
    %c0_1 = arith.constant 0 : index
    %0 = vector.load %arg1[%c0, %c0_0, %c0_1] : memref<2x5x9xf32, #tpu.memory_space<vmem>>, vector<2x5x9xf32>
    %c0_2 = arith.constant 0 : index
    %c0_3 = arith.constant 0 : index
    %c0_4 = arith.constant 0 : index
    %1 = vector.load %arg2[%c0_2, %c0_3, %c0_4] : memref<5x9x16xf32, #tpu.memory_space<vmem>>, vector<5x9x16xf32>
    %cst = arith.constant 0.000000e+00 : f32
    %2 = vector.broadcast %cst : f32 to vector<2x5x16xf32>
    %3 = vector.extract_strided_slice %0 {offsets = [0, 0, 0], sizes = [2, 5, 1], strides = [1, 1, 1]} : vector<2x5x9xf32> to vector<2x5x1xf32>
    %4 = vector.extract_strided_slice %1 {offsets = [0, 0, 0], sizes = [5, 1, 16], strides = [1, 1, 1]} : vector<5x9x16xf32> to vector<5x1x16xf32>
    %5 = vector.shape_cast %4 : vector<5x1x16xf32> to vector<5x16xf32>
    %6 = vector.shape_cast %5 : vector<5x16xf32> to vector<1x5x16xf32>
    %7 = vector.broadcast %3 : vector<2x5x1xf32> to vector<2x5x16xf32>
    %8 = vector.broadcast %6 : vector<1x5x16xf32> to vector<2x5x16xf32>
    %9 = arith.mulf %7, %8 : vector<2x5x16xf32>
    %10 = arith.addf %2, %9 : vector<2x5x16xf32>
    %11 = vector.extract_strided_slice %0 {offsets = [0, 0, 1], sizes = [2, 5, 1], strides = [1, 1, 1]} : vector<2x5x9xf32> to vector<2x5x1xf32>
    %12 = vector.extract_strided_slice %1 {offsets = [0, 1, 0], sizes = [5, 1, 16], strides = [1, 1, 1]} : vector<5x9x16xf32> to vector<5x1x16xf32>
    %13 = vector.shape_cast %12 : vector<5x1x16xf32> to vector<5x16xf32>
    %14 = vector.shape_cast %13 : vector<5x16xf32> to vector<1x5x16xf32>
    %15 = vector.broadcast %11 : vector<2x5x1xf32> to vector<2x5x16xf32>
    %16 = vector.broadcast %14 : vector<1x5x16xf32> to vector<2x5x16xf32>
    %17 = arith.mulf %15, %16 : vector<2x5x16xf32>
    %18 = arith.addf %10, %17 : vector<2x5x16xf32>
    %19 = vector.extract_strided_slice %0 {offsets = [0, 0, 2], sizes = [2, 5, 1], strides = [1, 1, 1]} : vector<2x5x9xf32> to vector<2x5x1xf32>
    %20 = vector.extract_strided_slice %1 {offsets = [0, 2, 0], sizes = [5, 1, 16], strides = [1, 1, 1]} : vector<5x9x16xf32> to vector<5x1x16xf32>
    %21 = vector.shape_cast %20 : vector<5x1x16xf32> to vector<5x16xf32>
    %22 = vector.shape_cast %21 : vector<5x16xf32> to vector<1x5x16xf32>
    %23 = vector.broadcast %19 : vector<2x5x1xf32> to vector<2x5x16xf32>
    %24 = vector.broadcast %22 : vector<1x5x16xf32> to vector<2x5x16xf32>
    %25 = arith.mulf %23, %24 : vector<2x5x16xf32>
    %26 = arith.addf %18, %25 : vector<2x5x16xf32>
    %27 = vector.extract_strided_slice %0 {offsets = [0, 0, 3], sizes = [2, 5, 1], strides = [1, 1, 1]} : vector<2x5x9xf32> to vector<2x5x1xf32>
    %28 = vector.extract_strided_slice %1 {offsets = [0, 3, 0], sizes = [5, 1, 16], strides = [1, 1, 1]} : vector<5x9x16xf32> to vector<5x1x16xf32>
    %29 = vector.shape_cast %28 : vector<5x1x16xf32> to vector<5x16xf32>
    %30 = vector.shape_cast %29 : vector<5x16xf32> to vector<1x5x16xf32>
    %31 = vector.broadcast %27 : vector<2x5x1xf32> to vector<2x5x16xf32>
    %32 = vector.broadcast %30 : vector<1x5x16xf32> to vector<2x5x16xf32>
    %33 = arith.mulf %31, %32 : vector<2x5x16xf32>
    %34 = arith.addf %26, %33 : vector<2x5x16xf32>
    %35 = vector.extract_strided_slice %0 {offsets = [0, 0, 4], sizes = [2, 5, 1], strides = [1, 1, 1]} : vector<2x5x9xf32> to vector<2x5x1xf32>
    %36 = vector.extract_strided_slice %1 {offsets = [0, 4, 0], sizes = [5, 1, 16], strides = [1, 1, 1]} : vector<5x9x16xf32> to vector<5x1x16xf32>
    %37 = vector.shape_cast %36 : vector<5x1x16xf32> to vector<5x16xf32>
    %38 = vector.shape_cast %37 : vector<5x16xf32> to vector<1x5x16xf32>
    %39 = vector.broadcast %35 : vector<2x5x1xf32> to vector<2x5x16xf32>
    %40 = vector.broadcast %38 : vector<1x5x16xf32> to vector<2x5x16xf32>
    %41 = arith.mulf %39, %40 : vector<2x5x16xf32>
    %42 = arith.addf %34, %41 : vector<2x5x16xf32>
    %43 = vector.extract_strided_slice %0 {offsets = [0, 0, 5], sizes = [2, 5, 1], strides = [1, 1, 1]} : vector<2x5x9xf32> to vector<2x5x1xf32>
    %44 = vector.extract_strided_slice %1 {offsets = [0, 5, 0], sizes = [5, 1, 16], strides = [1, 1, 1]} : vector<5x9x16xf32> to vector<5x1x16xf32>
    %45 = vector.shape_cast %44 : vector<5x1x16xf32> to vector<5x16xf32>
    %46 = vector.shape_cast %45 : vector<5x16xf32> to vector<1x5x16xf32>
    %47 = vector.broadcast %43 : vector<2x5x1xf32> to vector<2x5x16xf32>
    %48 = vector.broadcast %46 : vector<1x5x16xf32> to vector<2x5x16xf32>
    %49 = arith.mulf %47, %48 : vector<2x5x16xf32>
    %50 = arith.addf %42, %49 : vector<2x5x16xf32>
    %51 = vector.extract_strided_slice %0 {offsets = [0, 0, 6], sizes = [2, 5, 1], strides = [1, 1, 1]} : vector<2x5x9xf32> to vector<2x5x1xf32>
    %52 = vector.extract_strided_slice %1 {offsets = [0, 6, 0], sizes = [5, 1, 16], strides = [1, 1, 1]} : vector<5x9x16xf32> to vector<5x1x16xf32>
    %53 = vector.shape_cast %52 : vector<5x1x16xf32> to vector<5x16xf32>
    %54 = vector.shape_cast %53 : vector<5x16xf32> to vector<1x5x16xf32>
    %55 = vector.broadcast %51 : vector<2x5x1xf32> to vector<2x5x16xf32>
    %56 = vector.broadcast %54 : vector<1x5x16xf32> to vector<2x5x16xf32>
    %57 = arith.mulf %55, %56 : vector<2x5x16xf32>
    %58 = arith.addf %50, %57 : vector<2x5x16xf32>
    %59 = vector.extract_strided_slice %0 {offsets = [0, 0, 7], sizes = [2, 5, 1], strides = [1, 1, 1]} : vector<2x5x9xf32> to vector<2x5x1xf32>
    %60 = vector.extract_strided_slice %1 {offsets = [0, 7, 0], sizes = [5, 1, 16], strides = [1, 1, 1]} : vector<5x9x16xf32> to vector<5x1x16xf32>
    %61 = vector.shape_cast %60 : vector<5x1x16xf32> to vector<5x16xf32>
    %62 = vector.shape_cast %61 : vector<5x16xf32> to vector<1x5x16xf32>
    %63 = vector.broadcast %59 : vector<2x5x1xf32> to vector<2x5x16xf32>
    %64 = vector.broadcast %62 : vector<1x5x16xf32> to vector<2x5x16xf32>
    %65 = arith.mulf %63, %64 : vector<2x5x16xf32>
    %66 = arith.addf %58, %65 : vector<2x5x16xf32>
    %67 = vector.extract_strided_slice %0 {offsets = [0, 0, 8], sizes = [2, 5, 1], strides = [1, 1, 1]} : vector<2x5x9xf32> to vector<2x5x1xf32>
    %68 = vector.extract_strided_slice %1 {offsets = [0, 8, 0], sizes = [5, 1, 16], strides = [1, 1, 1]} : vector<5x9x16xf32> to vector<5x1x16xf32>
    %69 = vector.shape_cast %68 : vector<5x1x16xf32> to vector<5x16xf32>
    %70 = vector.shape_cast %69 : vector<5x16xf32> to vector<1x5x16xf32>
    %71 = vector.broadcast %67 : vector<2x5x1xf32> to vector<2x5x16xf32>
    %72 = vector.broadcast %70 : vector<1x5x16xf32> to vector<2x5x16xf32>
    %73 = arith.mulf %71, %72 : vector<2x5x16xf32>
    %74 = arith.addf %66, %73 : vector<2x5x16xf32>
    %c0_5 = arith.constant 0 : index
    %c0_6 = arith.constant 0 : index
    %c0_7 = arith.constant 0 : index
    %75 = vector.load %arg3[%c0_5, %c0_6, %c0_7] : memref<2x5x16xf32, #tpu.memory_space<vmem>>, vector<2x5x16xf32>
    tpu.vector_store %arg3[%c0_5, %c0_6, %c0_7], %74 {strides = array<i32>} : memref<2x5x16xf32, #tpu.memory_space<vmem>>, vector<2x5x16xf32>,
    return
  }
  func.func @transform_0(%arg0: i32) -> (i32, i32, i32) {
    %c0_i32 = arith.constant 0 : i32
    %c0_i32_0 = arith.constant 0 : i32
    %c0_i32_1 = arith.constant 0 : i32
    return %c0_i32, %arg0, %c0_i32_0 : i32, i32, i32
  }
  func.func @transform_1(%arg0: i32) -> (i32, i32, i32) {
    %c0_i32 = arith.constant 0 : i32
    %c0_i32_0 = arith.constant 0 : i32
    %c0_i32_1 = arith.constant 0 : i32
    return %arg0, %c0_i32, %c0_i32_0 : i32, i32, i32
  }
  func.func @transform_2(%arg0: i32) -> (i32, i32, i32) {
    %c0_i32 = arith.constant 0 : i32
    %c0_i32_0 = arith.constant 0 : i32
    %c0_i32_1 = arith.constant 0 : i32
    return %c0_i32, %arg0, %c0_i32_0 : i32, i32, i32
  }
}

</mosaic_0001>

<llo_original>
// kernel: tpu_custom_call.1
$region0: #{tpu_custom_call.1}
  #allocation0 [shape = 'u32[]', space=smem, size = 0x4, offset = 0x4, fixed_abs, tag = 'smem constant byte address 0x4 - core index']
  #allocation1 [shape = 'u32[144,128]{1,0:T(1,128)}', space=vmem, size = 0x12000, scoped, tag = 'internal scratch']
  %s0 = inlined_call_operand.vmem [shape: f32[2,5,9], index: 0, kind: input, shape index: {}]
  %s1 = inlined_call_operand.vmem [shape: f32[5,9,16], index: 1, kind: input, shape index: {}]
  %s2 = inlined_call_operand.vmem [shape: f32[2,5,16], index: 2, kind: output, shape index: {}]
  %s3 = sld [smem:[#allocation0]]
  $region18: #{tpu_custom_call.1} parent=0
    _
  %s5 = ssub.s32 1, %s3
  %s6 = scalar_select 0, %s5, %s3
  // Predicated region
  $region2: #{tpu_custom_call.1} parent=0 // pred_check
    _
  $region3: #{tpu_custom_call.1} parent=0 // pred_check_branch
    %8 = sbr.rel (0) target = $region5
  $region4: #{tpu_custom_call.1} parent=0 // pred_region
    _
  $region5: #{tpu_custom_call.1} parent=0 // pred_fallthru
    _
  // Predicated region
  $region6: #{tpu_custom_call.1} parent=0 // pred_check
    _
  $region7: #{tpu_custom_call.1} parent=0 // pred_check_branch
    %10 = sbr.rel (0) target = $region9
  $region8: #{tpu_custom_call.1} parent=0 // pred_region
    _
  $region9: #{tpu_custom_call.1} parent=0 // pred_fallthru
    _
  %v11 = vld [vmem:[%s0] sm:$0x1f]
  %v12 = vld [vmem:[%s0 + $0x8] sm:$0x1f]
  %v13 = vld [vmem:[%s1] sm:$0xff]
  %v14 = vld [vmem:[%s1 + $0x8] sm:$0x1]
  %v15 = vld [vmem:[%s1 + $0x10] sm:$0xff]
  %v16 = vld [vmem:[%s1 + $0x18] sm:$0x1]
  %v17 = vld [vmem:[%s1 + $0x20] sm:$0xff]
  %v18 = vld [vmem:[%s1 + $0x28] sm:$0x1]
  %v19 = vld [vmem:[%s1 + $0x30] sm:$0xff]
  %v20 = vld [vmem:[%s1 + $0x38] sm:$0x1]
  %v21 = vld [vmem:[%s1 + $0x40] sm:$0xff]
  %v22 = vld [vmem:[%s1 + $0x48] sm:$0x1]
  %24 = vset.pattern.permute.xlu0 0
  %25 = vperm.xlu0 %24, %v11
  %v26 = vpop.permute.xlu0 %25
  %29 = vset.pattern.permute.xlu0 0
  %30 = vperm.xlu0 %29, %v12
  %v31 = vpop.permute.xlu0 %30
  %v38 = vrot.slane %v15, 7
  %vm39 = vcmask 1041409
  %v40 = vsel %vm39, %v38, %v13
  %v41 = vrot.slane %v17, 6
  %vm42 = vcmask 1042434
  %v43 = vsel %vm42, %v41, %v40
  %v44 = vrot.slane %v19, 5
  %vm45 = vcmask 1043459
  %v46 = vsel %vm45, %v44, %v43
  %v47 = vrot.slane %v21, 4
  %vm48 = vcmask 1044484
  %v49 = vsel %vm48, %v47, %v46
  %v51 = vmul.f32 %v26, %v49
  %v52 = vmul.f32 %v31, %v49
  %v53 = vadd.f32 %v51, 0.0
  %v54 = vadd.f32 %v52, 0.0
  %55 = vset.pattern.permute.xlu0 1
  %56 = vperm.xlu0 %55, %v11
  %v57 = vpop.permute.xlu0 %56
  %59 = vset.pattern.permute.xlu0 1
  %60 = vperm.xlu0 %59, %v12
  %v61 = vpop.permute.xlu0 %60
  %v63 = vrot.slane %v13, 1
  %v64 = vsel %vm39, %v15, %v63
  %v65 = vrot.slane %v17, 7
  %v66 = vsel %vm42, %v65, %v64
  %v67 = vrot.slane %v19, 6
  %v68 = vsel %vm45, %v67, %v66
  %v69 = vrot.slane %v21, 5
  %v70 = vsel %vm48, %v69, %v68
  %v72 = vmul.f32 %v57, %v70
  %v73 = vmul.f32 %v61, %v70
  %v74 = vadd.f32 %v53, %v72
  %v75 = vadd.f32 %v54, %v73
  %76 = vset.pattern.permute.xlu0 2
  %77 = vperm.xlu0 %76, %v11
  %v78 = vpop.permute.xlu0 %77
  %80 = vset.pattern.permute.xlu0 2
  %81 = vperm.xlu0 %80, %v12
  %v82 = vpop.permute.xlu0 %81
  %v84 = vrot.slane %v13, 2
  %v85 = vrot.slane %v15, 1
  %v86 = vsel %vm39, %v85, %v84
  %v87 = vsel %vm42, %v17, %v86
  %v88 = vrot.slane %v19, 7
  %v89 = vsel %vm45, %v88, %v87
  %v90 = vrot.slane %v21, 6
  %v91 = vsel %vm48, %v90, %v89
  %v93 = vmul.f32 %v78, %v91
  %v94 = vmul.f32 %v82, %v91
  %v95 = vadd.f32 %v74, %v93
  %v96 = vadd.f32 %v75, %v94
  %97 = vset.pattern.permute.xlu0 3
  %98 = vperm.xlu0 %97, %v11
  %v99 = vpop.permute.xlu0 %98
  %101 = vset.pattern.permute.xlu0 3
  %102 = vperm.xlu0 %101, %v12
  %v103 = vpop.permute.xlu0 %102
  %v105 = vrot.slane %v13, 3
  %v106 = vrot.slane %v15, 2
  %v107 = vsel %vm39, %v106, %v105
  %v108 = vrot.slane %v17, 1
  %v109 = vsel %vm42, %v108, %v107
  %v110 = vsel %vm45, %v19, %v109
  %v111 = vrot.slane %v21, 7
  %v112 = vsel %vm48, %v111, %v110
  %v114 = vmul.f32 %v99, %v112
  %v115 = vmul.f32 %v103, %v112
  %v116 = vadd.f32 %v95, %v114
  %v117 = vadd.f32 %v96, %v115
  %118 = vset.pattern.permute.xlu0 4
  %119 = vperm.xlu0 %118, %v11
  %v120 = vpop.permute.xlu0 %119
  %122 = vset.pattern.permute.xlu0 4
  %123 = vperm.xlu0 %122, %v12
  %v124 = vpop.permute.xlu0 %123
  %v126 = vrot.slane %v13, 4
  %v127 = vrot.slane %v15, 3
  %v128 = vsel %vm39, %v127, %v126
  %v129 = vrot.slane %v17, 2
  %v130 = vsel %vm42, %v129, %v128
  %v131 = vrot.slane %v19, 1
  %v132 = vsel %vm45, %v131, %v130
  %v133 = vsel %vm48, %v21, %v132
  %v135 = vmul.f32 %v120, %v133
  %v136 = vmul.f32 %v124, %v133
  %v137 = vadd.f32 %v116, %v135
  %v138 = vadd.f32 %v117, %v136
  %139 = vset.pattern.permute.xlu0 5
  %140 = vperm.xlu0 %139, %v11
  %v141 = vpop.permute.xlu0 %140
  %143 = vset.pattern.permute.xlu0 5
  %144 = vperm.xlu0 %143, %v12
  %v145 = vpop.permute.xlu0 %144
  %v147 = vrot.slane %v13, 5
  %v148 = vrot.slane %v15, 4
  %v149 = vsel %vm39, %v148, %v147
  %v150 = vrot.slane %v17, 3
  %v151 = vsel %vm42, %v150, %v149
  %v152 = vrot.slane %v19, 2
  %v153 = vsel %vm45, %v152, %v151
  %v154 = vrot.slane %v21, 1
  %v155 = vsel %vm48, %v154, %v153
  %v157 = vmul.f32 %v141, %v155
  %v158 = vmul.f32 %v145, %v155
  %v159 = vadd.f32 %v137, %v157
  %v160 = vadd.f32 %v138, %v158
  %161 = vset.pattern.permute.xlu0 6
  %162 = vperm.xlu0 %161, %v11
  %v163 = vpop.permute.xlu0 %162
  %165 = vset.pattern.permute.xlu0 6
  %166 = vperm.xlu0 %165, %v12
  %v167 = vpop.permute.xlu0 %166
  %v169 = vrot.slane %v13, 6
  %v170 = vrot.slane %v15, 5
  %v171 = vsel %vm39, %v170, %v169
  %v172 = vrot.slane %v17, 4
  %v173 = vsel %vm42, %v172, %v171
  %v174 = vrot.slane %v19, 3
  %v175 = vsel %vm45, %v174, %v173
  %v176 = vrot.slane %v21, 2
  %v177 = vsel %vm48, %v176, %v175
  %v179 = vmul.f32 %v163, %v177
  %v180 = vmul.f32 %v167, %v177
  %v181 = vadd.f32 %v159, %v179
  %v182 = vadd.f32 %v160, %v180
  %183 = vset.pattern.permute.xlu0 7
  %184 = vperm.xlu0 %183, %v11
  %v185 = vpop.permute.xlu0 %184
  %187 = vset.pattern.permute.xlu0 7
  %188 = vperm.xlu0 %187, %v12
  %v189 = vpop.permute.xlu0 %188
  %v191 = vrot.slane %v13, 7
  %v192 = vrot.slane %v15, 6
  %v193 = vsel %vm39, %v192, %v191
  %v194 = vrot.slane %v17, 5
  %v195 = vsel %vm42, %v194, %v193
  %v196 = vrot.slane %v19, 4
  %v197 = vsel %vm45, %v196, %v195
  %v198 = vrot.slane %v21, 3
  %v199 = vsel %vm48, %v198, %v197
  %v201 = vmul.f32 %v185, %v199
  %v202 = vmul.f32 %v189, %v199
  %v203 = vadd.f32 %v181, %v201
  %v204 = vadd.f32 %v182, %v202
  %205 = vset.pattern.permute.xlu0 8
  %206 = vperm.xlu0 %205, %v11
  %v207 = vpop.permute.xlu0 %206
  %209 = vset.pattern.permute.xlu0 8
  %210 = vperm.xlu0 %209, %v12
  %v211 = vpop.permute.xlu0 %210
  %v218 = vrot.slane %v16, 7
  %v219 = vsel %vm39, %v218, %v14
  %v220 = vrot.slane %v18, 6
  %v221 = vsel %vm42, %v220, %v219
  %v222 = vrot.slane %v20, 5
  %v223 = vsel %vm45, %v222, %v221
  %v224 = vrot.slane %v22, 4
  %v225 = vsel %vm48, %v224, %v223
  %v227 = vmul.f32 %v207, %v225
  %v228 = vmul.f32 %v211, %v225
  %v229 = vadd.f32 %v203, %v227
  %v230 = vadd.f32 %v204, %v228
  %vm231 = vcmask 126976
  %232 = vst.msk [vmem:[%s2] sm:$0x1f] %vm231, %v229
  %233 = vst.msk [vmem:[%s2 + $0x8] sm:$0x1f] %vm231, %v230
  // Predicated region
  $region10: #{tpu_custom_call.1} parent=0 // pred_check
    _
  $region11: #{tpu_custom_call.1} parent=0 // pred_check_branch
    %235 = sbr.rel (0) target = $region13
  $region12: #{tpu_custom_call.1} parent=0 // pred_region
    _
  $region13: #{tpu_custom_call.1} parent=0 // pred_fallthru
    _
  // Predicated region
  $region14: #{tpu_custom_call.1} parent=0 // pred_check
    _
  $region15: #{tpu_custom_call.1} parent=0 // pred_check_branch
    %237 = sbr.rel (0) target = $region17
  $region16: #{tpu_custom_call.1} parent=0 // pred_region
    _
  $region17: #{tpu_custom_call.1} parent=0 // pred_fallthru
    _

</llo_original>
